<compile_context>
chip_gen: v7x
topology: tpu7x:2x2x1
jax: 0.10.0
libtpu: 0.0.40
codegen_flags: <defaults>
</compile_context>

<pallas_src>
import jax
import jax.numpy as jnp
from jax.experimental import pallas as pl
from jax.experimental.pallas import tpu as pltpu


def ggnn_kernel(h_ref, edge_ref, adj_ref,
                wh_ref, whh_ref, w2_ref, bias_ref,
                out_ref):
    f32 = jnp.float32
    BT, N, D = h_ref.shape
    E = edge_ref.shape[-1]
    BTN = BT * N

    h3 = h_ref[...]                       # (BT, N, D)
    adj3 = adj_ref[...].astype(f32)       # (BT, N, N)
    edge4 = edge_ref[...].astype(f32)     # (BT, N, N, E)
    biases = bias_ref[...]                # (3, 3D): [b_ih ; b_hh ; [Wb/N, 0, 0]]

    h2 = h3.reshape(BTN, D).astype(f32)   # flatten batch x nodes for wide matmuls

    # One fused h-side matmul: columns = [h W1s^T | h W3s^T | h Wih^T].
    hu = jnp.dot(h2, wh_ref[...], preferred_element_type=f32)       # (BTN, 5D)
    hw1 = hu[:, :D].reshape(BT, N, D)                                # neighbor term
    hw3 = hu[:, D:2 * D]                                             # self term
    gi = hu[:, 2 * D:] + biases[0:1, :]                              # GRU input gates

    # Adjacency-weighted sum over neighbors j, on the MXU (batched matmul).
    ah = jnp.einsum('bij,bjd->bid', adj3, hw1,
                    preferred_element_type=f32).reshape(BTN, D)

    # Edge aggregation: sum_j adj[i, j] * e[i, j, :].
    # TODO(synk): for large N chunk this over j (or contract it on the MXU) to
    # avoid materializing the (BT, N, N, E) product in VMEM / vregs.
    e_agg = jnp.sum(adj3[..., None] * edge4, axis=2)                 # (BT, N, E)
    ew = jnp.dot(e_agg.reshape(BTN, E), w2_ref[...],
                 preferred_element_type=f32)                         # (BTN, D)

    rowsum = jnp.sum(adj3.reshape(BTN, N), axis=-1, keepdims=True)   # (BTN, 1)
    wb = biases[2:3, :D]                                             # (1, D) = Wb/N

    # Mean message over j (the 1/N is already folded into wh/w2/wb).
    m = ah + ew + rowsum * (hw3 + wb)                                # (BTN, D)

    # GRUCell(input = h, hidden = m): one fused hidden-side matmul.
    gh = jnp.dot(m, whh_ref[...], preferred_element_type=f32) + biases[1:2, :]

    r = jax.nn.sigmoid(gi[:, :D] + gh[:, :D])
    z = jax.nn.sigmoid(gi[:, D:2 * D] + gh[:, D:2 * D])
    n = jnp.tanh(gi[:, 2 * D:] + r * gh[:, 2 * D:])
    new_h = (1.0 - z) * n + z * m

    out_ref[...] = jnp.maximum(new_h, 0.0).reshape(BT, N, D).astype(out_ref.dtype)


def _pick_block_b(B, N, D, E, budget_bytes=6 * 1024 * 1024):
    """Largest divisor of B (capped at 8) whose input blocks fit the budget."""
    if N % 8 != 0:          # keep leading-dim reshapes layout-trivial
        return 1
    per_graph = 4 * (N * N * E + N * N + 2 * N * D)
    cap = int(min(8, max(1, budget_bytes // max(per_graph, 1))))
    bt = 1
    for d in range(1, B + 1):
        if B % d == 0 and d <= cap:
            bt = d
    return bt


def ggnn_pallas(h, edge, adj, params, *, block_b=None):
    B, N, D = h.shape
    E = edge.shape[-1]
    f32 = jnp.float32

    W = params["W"].astype(f32)
    Wb = params["Wb"].astype(f32)
    Wih = params["Wih"].astype(f32)
    Whh = params["Whh"].astype(f32)
    bih = params["bih"].astype(f32)
    bhh = params["bhh"].astype(f32)

    # Split the message-MLP weight along its input dim ([h_j | e_ij | h_i]) and
    # fold the 1/N of the masked mean into it (exact for power-of-two N).
    inv_n = 1.0 / N
    w1s_t = W[:, :D].T * inv_n               # (D, D)
    w2s_t = W[:, D:D + E].T * inv_n          # (E, D)
    w3s_t = W[:, D + E:].T * inv_n           # (D, D)
    wbs = Wb * inv_n                         # (D,)

    # Fused, pre-transposed weight slabs (no .T inside the kernel).
    wh_slab = jnp.concatenate([w1s_t, w3s_t, Wih.T], axis=1)    # (D, 5D)
    whh_slab = Whh.T                                            # (D, 3D)
    w2_slab = w2s_t                                             # (E, D)

    # Packed bias slab: row 0 = b_ih, row 1 = b_hh, row 2 = [Wb/N, 0, 0].
    bias_slab = jnp.stack(
        [bih, bhh, jnp.concatenate([wbs, jnp.zeros((2 * D,), f32)])], axis=0)  # (3, 3D)

    BT = _pick_block_b(B, N, D, E) if block_b is None else block_b
    assert B % BT == 0, "block_b must divide the batch size"
    grid = (B // BT,)

    # Explicit VMEM budget sized to the tiles (double-buffered blocks + weights).
    blk_bytes = 4 * BT * (2 * N * D + N * N * E + N * N)
    wt_bytes = 4 * int(wh_slab.size + whh_slab.size + w2_slab.size + bias_slab.size)
    vmem_limit = int(min(max(2 * blk_bytes + 2 * wt_bytes + (2 << 20),
                             16 * 1024 * 1024),
                         64 * 1024 * 1024))

    # TODO(synk): for very large N (N*N*E blocks beyond ~16 MiB) add a second
    # grid axis tiling N_i and chunk the j-reduction (mandatory on v7x / v5e).
    in_specs = [
        pl.BlockSpec((BT, N, D), lambda g: (g, 0, 0)),
        pl.BlockSpec((BT, N, N, E), lambda g: (g, 0, 0, 0)),
        pl.BlockSpec((BT, N, N), lambda g: (g, 0, 0)),
        pl.BlockSpec(wh_slab.shape, lambda g: (0, 0)),
        pl.BlockSpec(whh_slab.shape, lambda g: (0, 0)),
        pl.BlockSpec(w2_slab.shape, lambda g: (0, 0)),
        pl.BlockSpec(bias_slab.shape, lambda g: (0, 0)),
    ]

    return pl.pallas_call(
        ggnn_kernel,
        out_shape=jax.ShapeDtypeStruct((B, N, D), jnp.float32),
        grid=grid,
        in_specs=in_specs,
        out_specs=pl.BlockSpec((BT, N, D), lambda g: (g, 0, 0)),
        compiler_params=pltpu.CompilerParams(
            dimension_semantics=("parallel",),
            vmem_limit_bytes=vmem_limit,
        ),
    )(h.astype(f32), edge.astype(f32), adj.astype(f32),
      wh_slab, whh_slab, w2_slab, bias_slab)


def ggnn_reference(h, edge, adj, params):
    """Pure-JAX transcription of the PyTorch forward (for verification)."""
    b, N, D = h.shape
    h1 = jnp.broadcast_to(h[:, None, :, :], (b, N, N, D))
    h2 = jnp.broadcast_to(h[:, :, None, :], (b, N, N, D))
    cat = jnp.concatenate([h1, edge, h2], axis=-1)
    m = cat @ params["W"].T + params["Wb"]
    m = m * adj[..., None]
    m = m.mean(axis=2)
    x = h.reshape(-1, D)
    hx = m.reshape(-1, D)
    gi = x @ params["Wih"].T + params["bih"]
    gh = hx @ params["Whh"].T + params["bhh"]
    r = jax.nn.sigmoid(gi[:, :D] + gh[:, :D])
    z = jax.nn.sigmoid(gi[:, D:2 * D] + gh[:, D:2 * D])
    n = jnp.tanh(gi[:, 2 * D:] + r * gh[:, 2 * D:])
    new_h = (1.0 - z) * n + z * hx
    return jax.nn.relu(new_h).reshape(b, N, D)


if __name__ == "__main__":
    B, N = 2, 8
    node_feature, edge_feature = 32, 16

    key = jax.random.PRNGKey(0)
    keys = jax.random.split(key, 10)

    h = jax.random.normal(keys[0], (B, N, node_feature), jnp.float32)
    edge = jax.random.normal(keys[1], (B, N, N, edge_feature), jnp.float32)
    adj = (jax.random.uniform(keys[2], (B, N, N)) > 0.5).astype(jnp.float32)

    D, E = node_feature, edge_feature
    params = {
        "W":   0.1 * jax.random.normal(keys[3], (D, 2 * D + E), jnp.float32),
        "Wb":  0.1 * jax.random.normal(keys[4], (D,), jnp.float32),
        "Wih": 0.1 * jax.random.normal(keys[5], (3 * D, D), jnp.float32),
        "Whh": 0.1 * jax.random.normal(keys[6], (3 * D, D), jnp.float32),
        "bih": 0.1 * jax.random.normal(keys[7], (3 * D,), jnp.float32),
        "bhh": 0.1 * jax.random.normal(keys[8], (3 * D,), jnp.float32),
    }

    out = ggnn_pallas(h, edge, adj, params)
    out = jax.block_until_ready(out)

    ref = ggnn_reference(h, edge, adj, params)
    assert out.shape == (B, N, node_feature)
    assert jnp.allclose(out, ref, rtol=1e-4, atol=1e-4), "mismatch vs reference"

    print("KERNEL_OK")
</pallas_src>

<mosaic_0001>
module attributes {stable_mosaic.version = 11 : i64} {
  func.func @ggnn_kernel(%arg0: i32, %arg1: memref<2x8x32xf32, #tpu.memory_space<vmem>>, %arg2: memref<2x8x8x16xf32, #tpu.memory_space<vmem>>, %arg3: memref<2x8x8xf32, #tpu.memory_space<vmem>>, %arg4: memref<32x160xf32, #tpu.memory_space<vmem>>, %arg5: memref<32x96xf32, #tpu.memory_space<vmem>>, %arg6: memref<16x32xf32, #tpu.memory_space<vmem>>, %arg7: memref<3x96xf32, #tpu.memory_space<vmem>>, %arg8: memref<2x8x32xf32, #tpu.memory_space<vmem>>) attributes {dimension_semantics = [#tpu.dimension_semantics<parallel>], iteration_bounds = array<i64: 1>, scalar_prefetch = 0 : i64, scratch_operands = 0 : i64, tpu.core_type = #tpu.core_type<tc>, window_params = [{transform_indices = @transform_0, window_bounds = array<i64: 2, 8, 32>}, {transform_indices = @transform_1, window_bounds = array<i64: 2, 8, 8, 16>}, {transform_indices = @transform_2, window_bounds = array<i64: 2, 8, 8>}, {pipeline_mode = #tpu.pipeline_mode<synchronous>, transform_indices = @transform_3, window_bounds = array<i64: 32, 160>}, {pipeline_mode = #tpu.pipeline_mode<synchronous>, transform_indices = @transform_4, window_bounds = array<i64: 32, 96>}, {pipeline_mode = #tpu.pipeline_mode<synchronous>, transform_indices = @transform_5, window_bounds = array<i64: 16, 32>}, {pipeline_mode = #tpu.pipeline_mode<synchronous>, transform_indices = @transform_6, window_bounds = array<i64: 3, 96>}, {transform_indices = @transform_7, window_bounds = array<i64: 2, 8, 32>}]} {
    %c0 = arith.constant 0 : index
    %c0_0 = arith.constant 0 : index
    %c0_1 = arith.constant 0 : index
    %0 = vector.load %arg1[%c0, %c0_0, %c0_1] : memref<2x8x32xf32, #tpu.memory_space<vmem>>, vector<2x8x32xf32>
    %c0_2 = arith.constant 0 : index
    %c0_3 = arith.constant 0 : index
    %c0_4 = arith.constant 0 : index
    %1 = vector.load %arg3[%c0_2, %c0_3, %c0_4] : memref<2x8x8xf32, #tpu.memory_space<vmem>>, vector<2x8x8xf32>
    %c0_5 = arith.constant 0 : index
    %c0_6 = arith.constant 0 : index
    %c0_7 = arith.constant 0 : index
    %c0_8 = arith.constant 0 : index
    %2 = vector.load %arg2[%c0_5, %c0_6, %c0_7, %c0_8] : memref<2x8x8x16xf32, #tpu.memory_space<vmem>>, vector<2x8x8x16xf32>
    %c0_9 = arith.constant 0 : index
    %c0_10 = arith.constant 0 : index
    %3 = vector.load %arg7[%c0_9, %c0_10] : memref<3x96xf32, #tpu.memory_space<vmem>>, vector<3x96xf32>
    %4 = vector.shape_cast %0 : vector<2x8x32xf32> to vector<16x32xf32>
    %c0_11 = arith.constant 0 : index
    %c0_12 = arith.constant 0 : index
    %5 = vector.load %arg4[%c0_11, %c0_12] : memref<32x160xf32, #tpu.memory_space<vmem>>, vector<32x160xf32>
    %cst = arith.constant dense<0.000000e+00> : vector<16x160xf32>
    %6 = tpu.matmul %4, %5, %cst {dimension_numbers = #tpu.dot_dimension_numbers<[1], [0], [0], [1], [0, 0, 1, 1], [], []>} : vector<16x32xf32>, vector<32x160xf32>, vector<16x160xf32> -> vector<16x160xf32>
    %7 = vector.extract_strided_slice %6 {offsets = [0, 0], sizes = [16, 32], strides = [1, 1]} : vector<16x160xf32> to vector<16x32xf32>
    %8 = vector.shape_cast %7 : vector<16x32xf32> to vector<2x8x32xf32>
    %9 = vector.extract_strided_slice %6 {offsets = [0, 32], sizes = [16, 32], strides = [1, 1]} : vector<16x160xf32> to vector<16x32xf32>
    %10 = vector.extract_strided_slice %6 {offsets = [0, 64], sizes = [16, 96], strides = [1, 1]} : vector<16x160xf32> to vector<16x96xf32>
    %11 = vector.extract_strided_slice %3 {offsets = [0, 0], sizes = [1, 96], strides = [1, 1]} : vector<3x96xf32> to vector<1x96xf32>
    %12 = vector.broadcast %11 : vector<1x96xf32> to vector<16x96xf32>
    %13 = arith.addf %10, %12 : vector<16x96xf32>
    "tpu.trace_start"() <{level = 10 : i32, message = "bij,bjd->bid"}> : () -> ()
    %cst_13 = arith.constant dense<0.000000e+00> : vector<2x8x32xf32>
    %14 = tpu.matmul %1, %8, %cst_13 {dimension_numbers = #tpu.dot_dimension_numbers<[2], [1], [1], [2], [0, 0, 0, 1, 1, 2], [0], [0]>} : vector<2x8x8xf32>, vector<2x8x32xf32>, vector<2x8x32xf32> -> vector<2x8x32xf32>
    "tpu.trace_stop"() : () -> ()
    %15 = vector.shape_cast %14 : vector<2x8x32xf32> to vector<16x32xf32>
    %16 = vector.shape_cast %1 : vector<2x8x8xf32> to vector<2x8x8x1xf32>
    %17 = vector.broadcast %16 : vector<2x8x8x1xf32> to vector<2x8x8x16xf32>
    %18 = arith.mulf %17, %2 : vector<2x8x8x16xf32>
    %cst_14 = arith.constant dense<0.000000e+00> : vector<2x8x16xf32>
    %19 = vector.multi_reduction <add>, %18, %cst_14 [2] : vector<2x8x8x16xf32> to vector<2x8x16xf32>
    %20 = vector.shape_cast %19 : vector<2x8x16xf32> to vector<16x16xf32>
    %c0_15 = arith.constant 0 : index
    %c0_16 = arith.constant 0 : index
    %21 = vector.load %arg6[%c0_15, %c0_16] : memref<16x32xf32, #tpu.memory_space<vmem>>, vector<16x32xf32>
    %cst_17 = arith.constant dense<0.000000e+00> : vector<16x32xf32>
    %22 = tpu.matmul %20, %21, %cst_17 {dimension_numbers = #tpu.dot_dimension_numbers<[1], [0], [0], [1], [0, 0, 1, 1], [], []>} : vector<16x16xf32>, vector<16x32xf32>, vector<16x32xf32> -> vector<16x32xf32>
    %23 = vector.shape_cast %1 : vector<2x8x8xf32> to vector<16x8xf32>
    %cst_18 = arith.constant dense<0.000000e+00> : vector<16xf32>
    %24 = vector.multi_reduction <add>, %23, %cst_18 [1] : vector<16x8xf32> to vector<16xf32>
    %25 = vector.shape_cast %24 : vector<16xf32> to vector<16x1xf32>
    %26 = vector.extract_strided_slice %3 {offsets = [2, 0], sizes = [1, 32], strides = [1, 1]} : vector<3x96xf32> to vector<1x32xf32>
    %27 = arith.addf %15, %22 : vector<16x32xf32>
    %28 = vector.broadcast %26 : vector<1x32xf32> to vector<16x32xf32>
    %29 = arith.addf %9, %28 : vector<16x32xf32>
    %30 = vector.broadcast %25 : vector<16x1xf32> to vector<16x32xf32>
    %31 = arith.mulf %30, %29 : vector<16x32xf32>
    %32 = arith.addf %27, %31 : vector<16x32xf32>
    %c0_19 = arith.constant 0 : index
    %c0_20 = arith.constant 0 : index
    %33 = vector.load %arg5[%c0_19, %c0_20] : memref<32x96xf32, #tpu.memory_space<vmem>>, vector<32x96xf32>
    %cst_21 = arith.constant dense<0.000000e+00> : vector<16x96xf32>
    %34 = tpu.matmul %32, %33, %cst_21 {dimension_numbers = #tpu.dot_dimension_numbers<[1], [0], [0], [1], [0, 0, 1, 1], [], []>} : vector<16x32xf32>, vector<32x96xf32>, vector<16x96xf32> -> vector<16x96xf32>
    %35 = vector.extract_strided_slice %3 {offsets = [1, 0], sizes = [1, 96], strides = [1, 1]} : vector<3x96xf32> to vector<1x96xf32>
    %36 = vector.broadcast %35 : vector<1x96xf32> to vector<16x96xf32>
    %37 = arith.addf %34, %36 : vector<16x96xf32>
    %38 = vector.extract_strided_slice %13 {offsets = [0, 0], sizes = [16, 32], strides = [1, 1]} : vector<16x96xf32> to vector<16x32xf32>
    %39 = vector.extract_strided_slice %37 {offsets = [0, 0], sizes = [16, 32], strides = [1, 1]} : vector<16x96xf32> to vector<16x32xf32>
    %40 = arith.addf %38, %39 : vector<16x32xf32>
    %41 = arith.negf %40 : vector<16x32xf32>
    %42 = math.exp %41 : vector<16x32xf32>
    %cst_22 = arith.constant 1.000000e+00 : f32
    %43 = vector.broadcast %cst_22 : f32 to vector<16x32xf32>
    %44 = arith.addf %43, %42 : vector<16x32xf32>
    %45 = arith.divf %43, %44 : vector<16x32xf32>
    %46 = vector.extract_strided_slice %13 {offsets = [0, 32], sizes = [16, 32], strides = [1, 1]} : vector<16x96xf32> to vector<16x32xf32>
    %47 = vector.extract_strided_slice %37 {offsets = [0, 32], sizes = [16, 32], strides = [1, 1]} : vector<16x96xf32> to vector<16x32xf32>
    %48 = arith.addf %46, %47 : vector<16x32xf32>
    %49 = arith.negf %48 : vector<16x32xf32>
    %50 = math.exp %49 : vector<16x32xf32>
    %cst_23 = arith.constant 1.000000e+00 : f32
    %51 = vector.broadcast %cst_23 : f32 to vector<16x32xf32>
    %52 = arith.addf %51, %50 : vector<16x32xf32>
    %53 = arith.divf %51, %52 : vector<16x32xf32>
    %54 = vector.extract_strided_slice %13 {offsets = [0, 64], sizes = [16, 32], strides = [1, 1]} : vector<16x96xf32> to vector<16x32xf32>
    %55 = vector.extract_strided_slice %37 {offsets = [0, 64], sizes = [16, 32], strides = [1, 1]} : vector<16x96xf32> to vector<16x32xf32>
    %56 = arith.mulf %45, %55 : vector<16x32xf32>
    %57 = arith.addf %54, %56 : vector<16x32xf32>
    %58 = math.tanh %57 : vector<16x32xf32>
    %cst_24 = arith.constant 1.000000e+00 : f32
    %59 = vector.broadcast %cst_24 : f32 to vector<16x32xf32>
    %60 = arith.subf %59, %53 : vector<16x32xf32>
    %61 = arith.mulf %60, %58 : vector<16x32xf32>
    %62 = arith.mulf %53, %32 : vector<16x32xf32>
    %63 = arith.addf %61, %62 : vector<16x32xf32>
    %cst_25 = arith.constant 0.000000e+00 : f32
    %64 = vector.broadcast %cst_25 : f32 to vector<16x32xf32>
    %65 = arith.maximumf %63, %64 : vector<16x32xf32>
    %66 = vector.shape_cast %65 : vector<16x32xf32> to vector<2x8x32xf32>
    %c0_26 = arith.constant 0 : index
    %c0_27 = arith.constant 0 : index
    %c0_28 = arith.constant 0 : index
    %67 = vector.load %arg8[%c0_26, %c0_27, %c0_28] : memref<2x8x32xf32, #tpu.memory_space<vmem>>, vector<2x8x32xf32>
    tpu.vector_store %arg8[%c0_26, %c0_27, %c0_28], %66 {strides = array<i32>} : memref<2x8x32xf32, #tpu.memory_space<vmem>>, vector<2x8x32xf32>,
    return
  }
  func.func @transform_0(%arg0: i32) -> (i32, i32, i32) {
    %c0_i32 = arith.constant 0 : i32
    %c0_i32_0 = arith.constant 0 : i32
    %c0_i32_1 = arith.constant 0 : i32
    return %arg0, %c0_i32, %c0_i32_0 : i32, i32, i32
  }
  func.func @transform_1(%arg0: i32) -> (i32, i32, i32, i32) {
    %c0_i32 = arith.constant 0 : i32
    %c0_i32_0 = arith.constant 0 : i32
    %c0_i32_1 = arith.constant 0 : i32
    %c0_i32_2 = arith.constant 0 : i32
    return %arg0, %c0_i32, %c0_i32_0, %c0_i32_1 : i32, i32, i32, i32
  }
  func.func @transform_2(%arg0: i32) -> (i32, i32, i32) {
    %c0_i32 = arith.constant 0 : i32
    %c0_i32_0 = arith.constant 0 : i32
    %c0_i32_1 = arith.constant 0 : i32
    return %arg0, %c0_i32, %c0_i32_0 : i32, i32, i32
  }
  func.func @transform_3(%arg0: i32) -> (i32, i32) {
    %c0_i32 = arith.constant 0 : i32
    %c0_i32_0 = arith.constant 0 : i32
    %c0_i32_1 = arith.constant 0 : i32
    return %c0_i32, %c0_i32_0 : i32, i32
  }
  func.func @transform_4(%arg0: i32) -> (i32, i32) {
    %c0_i32 = arith.constant 0 : i32
    %c0_i32_0 = arith.constant 0 : i32
    %c0_i32_1 = arith.constant 0 : i32
    return %c0_i32, %c0_i32_0 : i32, i32
  }
  func.func @transform_5(%arg0: i32) -> (i32, i32) {
    %c0_i32 = arith.constant 0 : i32
    %c0_i32_0 = arith.constant 0 : i32
    %c0_i32_1 = arith.constant 0 : i32
    return %c0_i32, %c0_i32_0 : i32, i32
  }
  func.func @transform_6(%arg0: i32) -> (i32, i32) {
    %c0_i32 = arith.constant 0 : i32
    %c0_i32_0 = arith.constant 0 : i32
    %c0_i32_1 = arith.constant 0 : i32
    return %c0_i32, %c0_i32_0 : i32, i32
  }
  func.func @transform_7(%arg0: i32) -> (i32, i32, i32) {
    %c0_i32 = arith.constant 0 : i32
    %c0_i32_0 = arith.constant 0 : i32
    %c0_i32_1 = arith.constant 0 : i32
    return %arg0, %c0_i32, %c0_i32_0 : i32, i32, i32
  }
}

</mosaic_0001>

<llo_original>
// kernel: tpu_custom_call.1
$region0: #{tpu_custom_call.1}
  #allocation0 [shape = 'u32[]', space=smem, size = 0x4, offset = 0x4, fixed_abs, tag = 'smem constant byte address 0x4 - core index']
  #allocation1 [shape = 'u32[144,128]{1,0:T(1,128)}', space=vmem, size = 0x12000, scoped, tag = 'internal scratch']
  %s0 = inlined_call_operand.hbm [shape: f32[2,8,32], index: 0, kind: input, shape index: {}]
  %s1 = inlined_call_operand.hbm [shape: f32[2,8,8,16], index: 1, kind: input, shape index: {}]
  %s2 = inlined_call_operand.hbm [shape: f32[2,8,8], index: 2, kind: input, shape index: {}]
  %s3 = inlined_call_operand.hbm [shape: f32[32,160], index: 3, kind: input, shape index: {}]
  %s4 = inlined_call_operand.hbm [shape: f32[32,96], index: 4, kind: input, shape index: {}]
  %s5 = inlined_call_operand.vmem [shape: f32[16,32], index: 5, kind: input, shape index: {}]
  %s6 = inlined_call_operand.vmem [shape: f32[3,96], index: 6, kind: input, shape index: {}]
  %s7 = inlined_call_operand.hbm [shape: f32[2,8,32], index: 7, kind: output, shape index: {}]
  %s8 = sld [smem:[#allocation0]]
  $region58: #{tpu_custom_call.1} parent=0
    _
  %s10 = ssub.s32 1, %s8
  %s11 = scalar_select 0, %s10, %s8
  $region1: #{tpu_custom_call.1} parent=0
    #allocation2 [shape = 'u8[8192]{0}', space=vmem, size = 0x2000, scoped, tag = 'input window, operand 0, single buffered']
    #allocation3 [shape = 's32[1]{0}', space=sflag, size = 0x4, scoped, tag = 'scoped memory for tpu_custom_call.1']
    #allocation4 [shape = 's32[1]{0}', space=sflag, size = 0x4, scoped, tag = 'scoped memory for tpu_custom_call.1']
    #allocation5 [shape = 'u8[65536]{0}', space=vmem, size = 0x10000, scoped, tag = 'input window, operand 1, single buffered']
    #allocation6 [shape = 's32[1]{0}', space=sflag, size = 0x4, scoped, tag = 'scoped memory for tpu_custom_call.1']
    #allocation7 [shape = 'u8[8192]{0}', space=vmem, size = 0x2000, scoped, tag = 'input window, operand 2, single buffered']
    #allocation8 [shape = 'u8[32768]{0}', space=vmem, size = 0x8000, scoped, tag = 'input window, operand 3, single buffered']
    #allocation9 [shape = 's32[1]{0}', space=sflag, size = 0x4, scoped, tag = 'scoped memory for tpu_custom_call.1']
    #allocation10 [shape = 'u8[16384]{0}', space=vmem, size = 0x4000, scoped, tag = 'input window, operand 4, single buffered']
    #allocation11 [shape = 'u8[8192]{0}', space=vmem, size = 0x2000, scoped, tag = 'output window, operand 0, single buffered']
    %12 = vsyncpa [#allocation3], 0
    %13 = vsyncpa [#allocation6], 0
    %14 = vsyncpa [#allocation9], 0
    %15 = vsyncpa [#allocation4], 0
    // Predicated region
    $region2: #{tpu_custom_call.1} parent=1 // pred_check
      _
    $region3: #{tpu_custom_call.1} parent=1 // pred_check_branch
      %17 = sbr.rel (0) target = $region5
    $region4: #{tpu_custom_call.1} parent=1 // pred_region
      %s19 = ssub.s32 256, 256
      %20 = vsyncadd [#allocation3], %s19
      %s21 = sshll.u32 [#allocation2], 4
      %s22 = int_to_ptr.vmem [resolvable:$true] %s21
      %27 = dma.hbm_to_vmem [thread:$0]  %s0, 256, %s22, [#allocation3], 128, 128, 8
    $region5: #{tpu_custom_call.1} parent=1 // pred_fallthru
      _
    // Predicated region
    $region6: #{tpu_custom_call.1} parent=1 // pred_check
      _
    $region7: #{tpu_custom_call.1} parent=1 // pred_check_branch
      %29 = sbr.rel (0) target = $region9
    $region8: #{tpu_custom_call.1} parent=1 // pred_region
      %s31 = ssub.s32 2048, 2048
      %32 = vsyncadd [#allocation6], %s31
      %s33 = sshll.u32 [#allocation5], 4
      %s34 = int_to_ptr.vmem [resolvable:$true] %s33
      %39 = dma.hbm_to_vmem [thread:$0]  %s1, 2048, %s34, [#allocation6], 128, 128, 8
    $region9: #{tpu_custom_call.1} parent=1 // pred_fallthru
      _
    // Predicated region
    $region10: #{tpu_custom_call.1} parent=1 // pred_check
      _
    $region11: #{tpu_custom_call.1} parent=1 // pred_check_branch
      %41 = sbr.rel (0) target = $region13
    $region12: #{tpu_custom_call.1} parent=1 // pred_region
      %s43 = ssub.s32 256, 256
      %44 = vsyncadd [#allocation6], %s43
      %s45 = sshll.u32 [#allocation7], 4
      %s46 = int_to_ptr.vmem [resolvable:$true] %s45
      %51 = dma.hbm_to_vmem [thread:$0]  %s2, 256, %s46, [#allocation6], 128, 128, 8
    $region13: #{tpu_custom_call.1} parent=1 // pred_fallthru
      _
    // Predicated region
    $region14: #{tpu_custom_call.1} parent=1 // pred_check
      _
    $region15: #{tpu_custom_call.1} parent=1 // pred_check_branch
      %53 = sbr.rel (0) target = $region17
    $region16: #{tpu_custom_call.1} parent=1 // pred_region
      %s55 = ssub.s32 1024, 1024
      %56 = vsyncadd [#allocation9], %s55
      %s57 = sshll.u32 [#allocation8], 4
      %s58 = int_to_ptr.vmem [resolvable:$true] %s57
      %63 = dma.hbm_to_vmem [thread:$0]  %s3, 1024, %s58, [#allocation9], 256, 256, 16
    $region17: #{tpu_custom_call.1} parent=1 // pred_fallthru
      _
    // Predicated region
    $region18: #{tpu_custom_call.1} parent=1 // pred_check
      _
    $region19: #{tpu_custom_call.1} parent=1 // pred_check_branch
      %65 = sbr.rel (0) target = $region21
    $region20: #{tpu_custom_call.1} parent=1 // pred_region
      %s67 = ssub.s32 512, 512
      %68 = vsyncadd [#allocation9], %s67
      %s69 = sshll.u32 [#allocation10], 4
      %s70 = int_to_ptr.vmem [resolvable:$true] %s69
      %75 = dma.hbm_to_vmem [thread:$0]  %s4, 512, %s70, [#allocation9], 128, 128, 8
    $region21: #{tpu_custom_call.1} parent=1 // pred_fallthru
      _
    // Predicated region
    $region22: #{tpu_custom_call.1} parent=1 // pred_check
      _
    $region23: #{tpu_custom_call.1} parent=1 // pred_check_branch
      %77 = sbr.rel (0) target = $region25
    $region24: #{tpu_custom_call.1} parent=1 // pred_region
      _
    $region25: #{tpu_custom_call.1} parent=1 // pred_fallthru
      _
    // Predicated region
    $region26: #{tpu_custom_call.1} parent=1 // pred_check
      _
    $region27: #{tpu_custom_call.1} parent=1 // pred_check_branch
      %79 = sbr.rel (0) target = $region29
    $region28: #{tpu_custom_call.1} parent=1 // pred_region
      _
    $region29: #{tpu_custom_call.1} parent=1 // pred_fallthru
      _
    // Predicated region
    $region30: #{tpu_custom_call.1} parent=1 // pred_check
      _
    $region31: #{tpu_custom_call.1} parent=1 // pred_check_branch
      %81 = sbr.rel (0) target = $region33
    $region32: #{tpu_custom_call.1} parent=1 // pred_region
      %82 = dma.done [#allocation3], 256
    $region33: #{tpu_custom_call.1} parent=1 // pred_fallthru
      _
    // Predicated region
    $region34: #{tpu_custom_call.1} parent=1 // pred_check
      _
    $region35: #{tpu_custom_call.1} parent=1 // pred_check_branch
      %84 = sbr.rel (0) target = $region37
    $region36: #{tpu_custom_call.1} parent=1 // pred_region
      %85 = dma.done [#allocation6], 2048
    $region37: #{tpu_custom_call.1} parent=1 // pred_fallthru
      _
    // Predicated region
    $region38: #{tpu_custom_call.1} parent=1 // pred_check
      _
    $region39: #{tpu_custom_call.1} parent=1 // pred_check_branch
      %87 = sbr.rel (0) target = $region41
    $region40: #{tpu_custom_call.1} parent=1 // pred_region
      %88 = dma.done [#allocation6], 256
    $region41: #{tpu_custom_call.1} parent=1 // pred_fallthru
      _
    // Predicated region
    $region42: #{tpu_custom_call.1} parent=1 // pred_check
      _
    $region43: #{tpu_custom_call.1} parent=1 // pred_check_branch
      %90 = sbr.rel (0) target = $region45
    $region44: #{tpu_custom_call.1} parent=1 // pred_region
      %91 = dma.done [#allocation9], 1024
    $region45: #{tpu_custom_call.1} parent=1 // pred_fallthru
      _
    // Predicated region
    $region46: #{tpu_custom_call.1} parent=1 // pred_check
      _
    $region47: #{tpu_custom_call.1} parent=1 // pred_check_branch
      %93 = sbr.rel (0) target = $region49
    $region48: #{tpu_custom_call.1} parent=1 // pred_region
      %94 = dma.done [#allocation9], 512
    $region49: #{tpu_custom_call.1} parent=1 // pred_fallthru
      _
    %v95 = vld [vmem:[#allocation2] sm:$0xff]
    %v96 = vld [vmem:[#allocation2 + $0x8] sm:$0xff]
    %v97 = vld [vmem:[#allocation7] sm:$0xff]
    %v98 = vld [vmem:[#allocation7 + $0x8] sm:$0xff]
    %v99 = vld [vmem:[#allocation5] sm:$0xff]
    %v100 = vld [vmem:[#allocation5 + $0x8] sm:$0xff]
    %v101 = vld [vmem:[#allocation5 + $0x10] sm:$0xff]
    %v102 = vld [vmem:[#allocation5 + $0x18] sm:$0xff]
    %v103 = vld [vmem:[#allocation5 + $0x20] sm:$0xff]
    %v104 = vld [vmem:[#allocation5 + $0x28] sm:$0xff]
    %v105 = vld [vmem:[#allocation5 + $0x30] sm:$0xff]
    %v106 = vld [vmem:[#allocation5 + $0x38] sm:$0xff]
    %v107 = vld [vmem:[#allocation5 + $0x40] sm:$0xff]
    %v108 = vld [vmem:[#allocation5 + $0x48] sm:$0xff]
    %v109 = vld [vmem:[#allocation5 + $0x50] sm:$0xff]
    %v110 = vld [vmem:[#allocation5 + $0x58] sm:$0xff]
    %v111 = vld [vmem:[#allocation5 + $0x60] sm:$0xff]
    %v112 = vld [vmem:[#allocation5 + $0x68] sm:$0xff]
    %v113 = vld [vmem:[#allocation5 + $0x70] sm:$0xff]
    %v114 = vld [vmem:[#allocation5 + $0x78] sm:$0xff]
    %v115 = vld [vmem:[%s6] sm:$0x7]
    %v116 = vld [vmem:[#allocation8] sm:$0xff]
    %v117 = vld [vmem:[#allocation8 + $0x8] sm:$0xff]
    %v118 = vld [vmem:[#allocation8 + $0x10] sm:$0xff]
    %v119 = vld [vmem:[#allocation8 + $0x18] sm:$0xff]
    %v120 = vld [vmem:[#allocation8 + $0x20] sm:$0xff]
    %v121 = vld [vmem:[#allocation8 + $0x28] sm:$0xff]
    %v122 = vld [vmem:[#allocation8 + $0x30] sm:$0xff]
    %v123 = vld [vmem:[#allocation8 + $0x38] sm:$0xff]
    %vm124 = vcmask 261120
    %v126 = vsel %vm124, %v95, 0
    %v129 = vsel %vm124, %v96, 0
    %131 = vmatprep.subr.mxu0 %v117
    %132 = vmatpush1.msra.mxu0 %v116
    %133 = vmatprep.subr.mxu0 %v119
    %134 = vmatpush1.msra.mxu0 %v118
    %135 = vmatprep.subr.mxu0 %v121
    %136 = vmatpush1.msra.mxu0 %v120
    %137 = vmatprep.subr.mxu0 %v123
    %138 = vmatpush1.msra.mxu0 %v122
    %139 = vmatprep.subr.mxu0 0.0
    %140 = vmatpush1.msra.mxu0 0.0
    %141 = vmatprep.subr.mxu0 0.0
    %142 = vmatpush1.msra.mxu0 0.0
    %143 = vmatprep.subr.mxu0 0.0
    %144 = vmatpush1.msra.mxu0 0.0
    %145 = vmatprep.subr.mxu0 0.0
    %146 = vmatpush1.msra.mxu0 0.0
    %147 = vmatprep.subr.mxu0 0.0
    %148 = vmatpush1.msra.mxu0 0.0
    %149 = vmatprep.subr.mxu0 0.0
    %150 = vmatpush1.msra.mxu0 0.0
    %151 = vmatprep.subr.mxu0 0.0
    %152 = vmatpush1.msra.mxu0 0.0
    %153 = vmatprep.subr.mxu0 0.0
    %154 = vmatpush1.msra.mxu0 0.0
    %155 = vmatprep.subr.mxu0 0.0
    %156 = vmatpush1.msra.mxu0 0.0
    %157 = vmatprep.subr.mxu0 0.0
    %158 = vmatpush1.msra.mxu0 0.0
    %159 = vmatprep.subr.mxu0 0.0
    %160 = vmatpush1.msra.mxu0 0.0
    %161 = vmatprep.subr.mxu0 0.0
    %162 = vmatpush1.msra.mxu0 0.0
    %163 = vmatprep.subr.mxu0 0.0
    %164 = vmatpush1.msra.mxu0 0.0
    %165 = vmatprep.subr.mxu0 0.0
    %166 = vmatpush1.msra.mxu0 0.0
    %167 = vmatprep.subr.mxu0 0.0
    %168 = vmatpush1.msra.mxu0 0.0
    %169 = vmatprep.subr.mxu0 0.0
    %170 = vmatpush1.msra.mxu0 0.0
    %171 = vmatprep.subr.mxu0 0.0
    %172 = vmatpush1.msra.mxu0 0.0
    %173 = vmatprep.subr.mxu0 0.0
    %174 = vmatpush1.msra.mxu0 0.0
    %175 = vmatprep.subr.mxu0 0.0
    %176 = vmatpush1.msra.mxu0 0.0
    %177 = vmatprep.subr.mxu0 0.0
    %178 = vmatpush1.msra.mxu0 0.0
    %179 = vmatprep.subr.mxu0 0.0
    %180 = vmatpush1.msra.mxu0 0.0
    %181 = vmatprep.subr.mxu0 0.0
    %182 = vmatpush1.msra.mxu0 0.0
    %183 = vmatprep.subr.mxu0 0.0
    %184 = vmatpush1.msra.mxu0 0.0
    %185 = vmatprep.subr.mxu0 0.0
    %186 = vmatpush1.msra.mxu0 0.0
    %187 = vmatprep.subr.mxu0 0.0
    %188 = vmatpush1.msra.mxu0 0.0
    %189 = vmatprep.subr.mxu0 0.0
    %190 = vmatpush1.msra.mxu0 0.0
    %191 = vmatprep.subr.mxu0 0.0
    %192 = vmatpush1.msra.mxu0 0.0
    %193 = vmatprep.subr.mxu0 0.0
    %194 = vmatpush1.msra.mxu0 0.0
    %195 = vmatprep.mubr.f32.mxu0 0.0
    %196 = vmatmul.mubr.f32.gmra.mrb[0].mxu0 %v126
    %v197 = vpop.f32.mrb[0].mxu0
    %v198 = vadd.f32 0.0, %v197
    %v199 = vpop.f32.mrb[0].mxu0
    %v200 = vadd.f32 0.0, %v199
    %201 = vmatprep.mubr.f32.mxu0 0.0
    %202 = vmatmul.mubr.f32.gmra.mrb[0].mxu0 %v129
    %v203 = vpop.f32.mrb[0].mxu0
    %v204 = vadd.f32 0.0, %v203
    %v205 = vpop.f32.mrb[0].mxu0
    %v206 = vadd.f32 0.0, %v205
    %207 = vdwg.mxu0
    %v208 = vlaneseq
    %v209 = vshrl.u32 %v208, 7
    %v210 = vsub.s32 0, %v209
    %v211 = vrot.slane %v115, %v210
    %213 = vrot.lane.b32.xlu0 %v211, 64
    %v214 = vpop.permute.xlu0 %213
    %v216 = vadd.f32 %v198, %v214
    %v217 = vadd.f32 %v200, %v214
    %v218 = vadd.f32 %v204, %v214
    %v219 = vadd.f32 %v206, %v214
    %vm220 = vcmask 64512
    %v222 = vsel %vm220, %v97, 0
    %224 = vmatprep.subr.mxu0 0.0
    %225 = vmatpush1.msra.mxu0 %v198
    %226 = vmatprep.subr.mxu0 0.0
    %227 = vmatpush1.msra.mxu0 0.0
    %228 = vmatprep.subr.mxu0 0.0
    %229 = vmatpush1.msra.mxu0 0.0
    %230 = vmatprep.subr.mxu0 0.0
    %231 = vmatpush1.msra.mxu0 0.0
    %232 = vmatprep.subr.mxu0 0.0
    %233 = vmatpush1.msra.mxu0 0.0
    %234 = vmatprep.subr.mxu0 0.0
    %235 = vmatpush1.msra.mxu0 0.0
    %236 = vmatprep.subr.mxu0 0.0
    %237 = vmatpush1.msra.mxu0 0.0
    %238 = vmatprep.subr.mxu0 0.0
    %239 = vmatpush1.msra.mxu0 0.0
    %240 = vmatprep.subr.mxu0 0.0
    %241 = vmatpush1.msra.mxu0 0.0
    %242 = vmatprep.subr.mxu0 0.0
    %243 = vmatpush1.msra.mxu0 0.0
    %244 = vmatprep.subr.mxu0 0.0
    %245 = vmatpush1.msra.mxu0 0.0
    %246 = vmatprep.subr.mxu0 0.0
    %247 = vmatpush1.msra.mxu0 0.0
    %248 = vmatprep.subr.mxu0 0.0
    %249 = vmatpush1.msra.mxu0 0.0
    %250 = vmatprep.subr.mxu0 0.0
    %251 = vmatpush1.msra.mxu0 0.0
    %252 = vmatprep.subr.mxu0 0.0
    %253 = vmatpush1.msra.mxu0 0.0
    %254 = vmatprep.subr.mxu0 0.0
    %255 = vmatpush1.msra.mxu0 0.0
    %256 = vmatprep.subr.mxu0 0.0
    %257 = vmatpush1.msra.mxu0 0.0
    %258 = vmatprep.subr.mxu0 0.0
    %259 = vmatpush1.msra.mxu0 0.0
    %260 = vmatprep.subr.mxu0 0.0
    %261 = vmatpush1.msra.mxu0 0.0
    %262 = vmatprep.subr.mxu0 0.0
    %263 = vmatpush1.msra.mxu0 0.0
    %264 = vmatprep.subr.mxu0 0.0
    %265 = vmatpush1.msra.mxu0 0.0
    %266 = vmatprep.subr.mxu0 0.0
    %267 = vmatpush1.msra.mxu0 0.0
    %268 = vmatprep.subr.mxu0 0.0
    %269 = vmatpush1.msra.mxu0 0.0
    %270 = vmatprep.subr.mxu0 0.0
    %271 = vmatpush1.msra.mxu0 0.0
    %272 = vmatprep.subr.mxu0 0.0
    %273 = vmatpush1.msra.mxu0 0.0
    %274 = vmatprep.subr.mxu0 0.0
    %275 = vmatpush1.msra.mxu0 0.0
    %276 = vmatprep.subr.mxu0 0.0
    %277 = vmatpush1.msra.mxu0 0.0
    %278 = vmatprep.subr.mxu0 0.0
    %279 = vmatpush1.msra.mxu0 0.0
    %280 = vmatprep.subr.mxu0 0.0
    %281 = vmatpush1.msra.mxu0 0.0
    %282 = vmatprep.subr.mxu0 0.0
    %283 = vmatpush1.msra.mxu0 0.0
    %284 = vmatprep.subr.mxu0 0.0
    %285 = vmatpush1.msra.mxu0 0.0
    %286 = vmatprep.subr.mxu0 0.0
    %287 = vmatpush1.msra.mxu0 0.0
    %288 = vmatprep.mubr.f32.mxu0 0.0
    %289 = vmatmul.mubr.f32.gmra.mrb[0].mxu0 %v222
    %v290 = vpop.f32.mrb[0].mxu0
    %v291 = vadd.f32 0.0, %v290
    %v292 = vpop.f32.mrb[0].mxu0
    %293 = vdwg.mxu0
    %v295 = vsel %vm220, %v98, 0
    %297 = vmatprep.subr.mxu0 0.0
    %298 = vmatpush1.msra.mxu0 %v204
    %299 = vmatprep.subr.mxu0 0.0
    %300 = vmatpush1.msra.mxu0 0.0
    %301 = vmatprep.subr.mxu0 0.0
    %302 = vmatpush1.msra.mxu0 0.0
    %303 = vmatprep.subr.mxu0 0.0
    %304 = vmatpush1.msra.mxu0 0.0
    %305 = vmatprep.subr.mxu0 0.0
    %306 = vmatpush1.msra.mxu0 0.0
    %307 = vmatprep.subr.mxu0 0.0
    %308 = vmatpush1.msra.mxu0 0.0
    %309 = vmatprep.subr.mxu0 0.0
    %310 = vmatpush1.msra.mxu0 0.0
    %311 = vmatprep.subr.mxu0 0.0
    %312 = vmatpush1.msra.mxu0 0.0
    %313 = vmatprep.subr.mxu0 0.0
    %314 = vmatpush1.msra.mxu0 0.0
    %315 = vmatprep.subr.mxu0 0.0
    %316 = vmatpush1.msra.mxu0 0.0
    %317 = vmatprep.subr.mxu0 0.0
    %318 = vmatpush1.msra.mxu0 0.0
    %319 = vmatprep.subr.mxu0 0.0
    %320 = vmatpush1.msra.mxu0 0.0
    %321 = vmatprep.subr.mxu0 0.0
    %322 = vmatpush1.msra.mxu0 0.0
    %323 = vmatprep.subr.mxu0 0.0
    %324 = vmatpush1.msra.mxu0 0.0
    %325 = vmatprep.subr.mxu0 0.0
    %326 = vmatpush1.msra.mxu0 0.0
    %327 = vmatprep.subr.mxu0 0.0
    %328 = vmatpush1.msra.mxu0 0.0
    %329 = vmatprep.subr.mxu0 0.0
    %330 = vmatpush1.msra.mxu0 0.0
    %331 = vmatprep.subr.mxu0 0.0
    %332 = vmatpush1.msra.mxu0 0.0
    %333 = vmatprep.subr.mxu0 0.0
    %334 = vmatpush1.msra.mxu0 0.0
    %335 = vmatprep.subr.mxu0 0.0
    %336 = vmatpush1.msra.mxu0 0.0
    %337 = vmatprep.subr.mxu0 0.0
    %338 = vmatpush1.msra.mxu0 0.0
    %339 = vmatprep.subr.mxu0 0.0
    %340 = vmatpush1.msra.mxu0 0.0
    %341 = vmatprep.subr.mxu0 0.0
    %342 = vmatpush1.msra.mxu0 0.0
    %343 = vmatprep.subr.mxu0 0.0
    %344 = vmatpush1.msra.mxu0 0.0
    %345 = vmatprep.subr.mxu0 0.0
    %346 = vmatpush1.msra.mxu0 0.0
    %347 = vmatprep.subr.mxu0 0.0
    %348 = vmatpush1.msra.mxu0 0.0
    %349 = vmatprep.subr.mxu0 0.0
    %350 = vmatpush1.msra.mxu0 0.0
    %351 = vmatprep.subr.mxu0 0.0
    %352 = vmatpush1.msra.mxu0 0.0
    %353 = vmatprep.subr.mxu0 0.0
    %354 = vmatpush1.msra.mxu0 0.0
    %355 = vmatprep.subr.mxu0 0.0
    %356 = vmatpush1.msra.mxu0 0.0
    %357 = vmatprep.subr.mxu0 0.0
    %358 = vmatpush1.msra.mxu0 0.0
    %359 = vmatprep.subr.mxu0 0.0
    %360 = vmatpush1.msra.mxu0 0.0
    %361 = vmatprep.mubr.f32.mxu0 0.0
    %362 = vmatmul.mubr.f32.gmra.mrb[0].mxu0 %v295
    %v363 = vpop.f32.mrb[0].mxu0
    %v364 = vadd.f32 0.0, %v363
    %v365 = vpop.f32.mrb[0].mxu0
    %366 = vdwg.mxu0
    %v367 = vlaneseq
    %v368 = vshrl.u32 %v367, 7
    %v369 = vsub.s32 0, %v368
    %v370 = vrot.slane %v97, %v369
    %372 = vbcast.lane.b32.xlu0 %v370, 256
    %v373 = vpop.permute.xlu0 %372
    %v374 = vlaneseq
    %v375 = vshrl.u32 %v374, 7
    %v376 = vsub.s32 1, %v375
    %v377 = vrot.slane %v97, %v376
    %379 = vbcast.lane.b32.xlu0 %v377, 256
    %v380 = vpop.permute.xlu0 %379
    %v381 = vlaneseq
    %v382 = vshrl.u32 %v381, 7
    %v383 = vsub.s32 2, %v382
    %v384 = vrot.slane %v97, %v383
    %386 = vbcast.lane.b32.xlu0 %v384, 256
    %v387 = vpop.permute.xlu0 %386
    %v388 = vlaneseq
    %v389 = vshrl.u32 %v388, 7
    %v390 = vsub.s32 3, %v389
    %v391 = vrot.slane %v97, %v390
    %393 = vbcast.lane.b32.xlu0 %v391, 256
    %v394 = vpop.permute.xlu0 %393
    %v395 = vlaneseq
    %v396 = vshrl.u32 %v395, 7
    %v397 = vsub.s32 4, %v396
    %v398 = vrot.slane %v97, %v397
    %400 = vbcast.lane.b32.xlu0 %v398, 256
    %v401 = vpop.permute.xlu0 %400
    %v402 = vlaneseq
    %v403 = vshrl.u32 %v402, 7
    %v404 = vsub.s32 5, %v403
    %v405 = vrot.slane %v97, %v404
    %407 = vbcast.lane.b32.xlu0 %v405, 256
    %v408 = vpop.permute.xlu0 %407
    %v409 = vlaneseq
    %v410 = vshrl.u32 %v409, 7
    %v411 = vsub.s32 6, %v410
    %v412 = vrot.slane %v97, %v411
    %414 = vbcast.lane.b32.xlu0 %v412, 256
    %v415 = vpop.permute.xlu0 %414
    %v416 = vlaneseq
    %v417 = vshrl.u32 %v416, 7
    %v418 = vsub.s32 7, %v417
    %v419 = vrot.slane %v97, %v418
    %421 = vbcast.lane.b32.xlu0 %v419, 256
    %v422 = vpop.permute.xlu0 %421
    %v423 = vlaneseq
    %v424 = vshrl.u32 %v423, 7
    %v425 = vsub.s32 0, %v424
    %v426 = vrot.slane %v98, %v425
    %428 = vbcast.lane.b32.xlu0 %v426, 256
    %v429 = vpop.permute.xlu0 %428
    %v430 = vlaneseq
    %v431 = vshrl.u32 %v430, 7
    %v432 = vsub.s32 1, %v431
    %v433 = vrot.slane %v98, %v432
    %435 = vbcast.lane.b32.xlu0 %v433, 256
    %v436 = vpop.permute.xlu0 %435
    %v437 = vlaneseq
    %v438 = vshrl.u32 %v437, 7
    %v439 = vsub.s32 2, %v438
    %v440 = vrot.slane %v98, %v439
    %442 = vbcast.lane.b32.xlu0 %v440, 256
    %v443 = vpop.permute.xlu0 %442
    %v444 = vlaneseq
    %v445 = vshrl.u32 %v444, 7
    %v446 = vsub.s32 3, %v445
    %v447 = vrot.slane %v98, %v446
    %449 = vbcast.lane.b32.xlu0 %v447, 256
    %v450 = vpop.permute.xlu0 %449
    %v451 = vlaneseq
    %v452 = vshrl.u32 %v451, 7
    %v453 = vsub.s32 4, %v452
    %v454 = vrot.slane %v98, %v453
    %456 = vbcast.lane.b32.xlu0 %v454, 256
    %v457 = vpop.permute.xlu0 %456
    %v458 = vlaneseq
    %v459 = vshrl.u32 %v458, 7
    %v460 = vsub.s32 5, %v459
    %v461 = vrot.slane %v98, %v460
    %463 = vbcast.lane.b32.xlu0 %v461, 256
    %v464 = vpop.permute.xlu0 %463
    %v465 = vlaneseq
    %v466 = vshrl.u32 %v465, 7
    %v467 = vsub.s32 6, %v466
    %v468 = vrot.slane %v98, %v467
    %470 = vbcast.lane.b32.xlu0 %v468, 256
    %v471 = vpop.permute.xlu0 %470
    %v472 = vlaneseq
    %v473 = vshrl.u32 %v472, 7
    %v474 = vsub.s32 7, %v473
    %v475 = vrot.slane %v98, %v474
    %477 = vbcast.lane.b32.xlu0 %v475, 256
    %v478 = vpop.permute.xlu0 %477
    %v479 = vmul.f32 %v373, %v99
    %v480 = vmul.f32 %v380, %v100
    %v481 = vmul.f32 %v387, %v101
    %v482 = vmul.f32 %v394, %v102
    %v483 = vmul.f32 %v401, %v103
    %v484 = vmul.f32 %v408, %v104
    %v485 = vmul.f32 %v415, %v105
    %v486 = vmul.f32 %v422, %v106
    %v487 = vmul.f32 %v429, %v107
    %v488 = vmul.f32 %v436, %v108
    %v489 = vmul.f32 %v443, %v109
    %v490 = vmul.f32 %v450, %v110
    %v491 = vmul.f32 %v457, %v111
    %v492 = vmul.f32 %v464, %v112
    %v493 = vmul.f32 %v471, %v113
    %v494 = vmul.f32 %v478, %v114
    %vm495 = vcmask 130048
    %v496 = vsel %vm495, %v479, 0.0
    %v497 = vrot.slane %v496, 4
    %v498 = vadd.f32 %v496, %v497
    %v499 = vrot.slane %v498, 2
    %v500 = vadd.f32 %v498, %v499
    %v501 = vrot.slane %v500, 1
    %v502 = vadd.f32 %v500, %v501
    %v503 = vsel %vm495, %v480, 0.0
    %v504 = vrot.slane %v503, 4
    %v505 = vadd.f32 %v503, %v504
    %v506 = vrot.slane %v505, 2
    %v507 = vadd.f32 %v505, %v506
    %v508 = vrot.slane %v507, 1
    %v509 = vadd.f32 %v507, %v508
    %v510 = vsel %vm495, %v481, 0.0
    %v511 = vrot.slane %v510, 4
    %v512 = vadd.f32 %v510, %v511
    %v513 = vrot.slane %v512, 2
    %v514 = vadd.f32 %v512, %v513
    %v515 = vrot.slane %v514, 1
    %v516 = vadd.f32 %v514, %v515
    %v517 = vsel %vm495, %v482, 0.0
    %v518 = vrot.slane %v517, 4
    %v519 = vadd.f32 %v517, %v518
    %v520 = vrot.slane %v519, 2
    %v521 = vadd.f32 %v519, %v520
    %v522 = vrot.slane %v521, 1
    %v523 = vadd.f32 %v521, %v522
    %v524 = vsel %vm495, %v483, 0.0
    %v525 = vrot.slane %v524, 4
    %v526 = vadd.f32 %v524, %v525
    %v527 = vrot.slane %v526, 2
    %v528 = vadd.f32 %v526, %v527
    %v529 = vrot.slane %v528, 1
    %v530 = vadd.f32 %v528, %v529
    %v531 = vsel %vm495, %v484, 0.0
    %v532 = vrot.slane %v531, 4
    %v533 = vadd.f32 %v531, %v532
    %v534 = vrot.slane %v533, 2
    %v535 = vadd.f32 %v533, %v534
    %v536 = vrot.slane %v535, 1
    %v537 = vadd.f32 %v535, %v536
    %v538 = vsel %vm495, %v485, 0.0
    %v539 = vrot.slane %v538, 4
    %v540 = vadd.f32 %v538, %v539
    %v541 = vrot.slane %v540, 2
    %v542 = vadd.f32 %v540, %v541
    %v543 = vrot.slane %v542, 1
    %v544 = vadd.f32 %v542, %v543
    %v545 = vsel %vm495, %v486, 0.0
    %v546 = vrot.slane %v545, 4
    %v547 = vadd.f32 %v545, %v546
    %v548 = vrot.slane %v547, 2
    %v549 = vadd.f32 %v547, %v548
    %v550 = vrot.slane %v549, 1
    %v551 = vadd.f32 %v549, %v550
    %v552 = vsel %vm495, %v487, 0.0
    %v553 = vrot.slane %v552, 4
    %v554 = vadd.f32 %v552, %v553
    %v555 = vrot.slane %v554, 2
    %v556 = vadd.f32 %v554, %v555
    %v557 = vrot.slane %v556, 1
    %v558 = vadd.f32 %v556, %v557
    %v559 = vsel %vm495, %v488, 0.0
    %v560 = vrot.slane %v559, 4
    %v561 = vadd.f32 %v559, %v560
    %v562 = vrot.slane %v561, 2
    %v563 = vadd.f32 %v561, %v562
    %v564 = vrot.slane %v563, 1
    %v565 = vadd.f32 %v563, %v564
    %v566 = vsel %vm495, %v489, 0.0
    %v567 = vrot.slane %v566, 4
    %v568 = vadd.f32 %v566, %v567
    %v569 = vrot.slane %v568, 2
    %v570 = vadd.f32 %v568, %v569
    %v571 = vrot.slane %v570, 1
    %v572 = vadd.f32 %v570, %v571
    %v573 = vsel %vm495, %v490, 0.0
    %v574 = vrot.slane %v573, 4
    %v575 = vadd.f32 %v573, %v574
    %v576 = vrot.slane %v575, 2
    %v577 = vadd.f32 %v575, %v576
    %v578 = vrot.slane %v577, 1
    %v579 = vadd.f32 %v577, %v578
    %v580 = vsel %vm495, %v491, 0.0
    %v581 = vrot.slane %v580, 4
    %v582 = vadd.f32 %v580, %v581
    %v583 = vrot.slane %v582, 2
    %v584 = vadd.f32 %v582, %v583
    %v585 = vrot.slane %v584, 1
    %v586 = vadd.f32 %v584, %v585
    %v587 = vsel %vm495, %v492, 0.0
    %v588 = vrot.slane %v587, 4
    %v589 = vadd.f32 %v587, %v588
    %v590 = vrot.slane %v589, 2
    %v591 = vadd.f32 %v589, %v590
    %v592 = vrot.slane %v591, 1
    %v593 = vadd.f32 %v591, %v592
    %v594 = vsel %vm495, %v493, 0.0
    %v595 = vrot.slane %v594, 4
    %v596 = vadd.f32 %v594, %v595
    %v597 = vrot.slane %v596, 2
    %v598 = vadd.f32 %v596, %v597
    %v599 = vrot.slane %v598, 1
    %v600 = vadd.f32 %v598, %v599
    %v601 = vsel %vm495, %v494, 0.0
    %v602 = vrot.slane %v601, 4
    %v603 = vadd.f32 %v601, %v602
    %v604 = vrot.slane %v603, 2
    %v605 = vadd.f32 %v603, %v604
    %v606 = vrot.slane %v605, 1
    %v607 = vadd.f32 %v605, %v606
    %v608 = vld [vmem:[%s5] sm:$0xff]
    %v609 = vld [vmem:[%s5 + $0x8] sm:$0xff]
    %vm626 = vcmask 1041409
    %v627 = vsel %vm626, %v509, %v502
    %vm628 = vcmask 1042434
    %v629 = vsel %vm628, %v516, %v627
    %vm630 = vcmask 1043459
    %v631 = vsel %vm630, %v523, %v629
    %vm632 = vcmask 1044484
    %v633 = vsel %vm632, %v530, %v631
    %vm634 = vcmask 1045509
    %v635 = vsel %vm634, %v537, %v633
    %vm636 = vcmask 1046534
    %v637 = vsel %vm636, %v544, %v635
    %vm638 = vcmask 1047559
    %v639 = vsel %vm638, %v551, %v637
    %v640 = vsel %vm626, %v565, %v558
    %v641 = vsel %vm628, %v572, %v640
    %v642 = vsel %vm630, %v579, %v641
    %v643 = vsel %vm632, %v586, %v642
    %v644 = vsel %vm634, %v593, %v643
    %v645 = vsel %vm636, %v600, %v644
    %v646 = vsel %vm638, %v607, %v645
    %v647 = vsel %vm495, %v639, 0
    %v649 = vsel %vm495, %v646, 0
    %651 = vmatprep.subr.mxu0 0.0
    %652 = vmatpush1.msra.mxu0 %v608
    %653 = vmatprep.subr.mxu0 0.0
    %654 = vmatpush1.msra.mxu0 %v609
    %655 = vmatprep.subr.mxu0 0.0
    %656 = vmatpush1.msra.mxu0 0.0
    %657 = vmatprep.subr.mxu0 0.0
    %658 = vmatpush1.msra.mxu0 0.0
    %659 = vmatprep.subr.mxu0 0.0
    %660 = vmatpush1.msra.mxu0 0.0
    %661 = vmatprep.subr.mxu0 0.0
    %662 = vmatpush1.msra.mxu0 0.0
    %663 = vmatprep.subr.mxu0 0.0
    %664 = vmatpush1.msra.mxu0 0.0
    %665 = vmatprep.subr.mxu0 0.0
    %666 = vmatpush1.msra.mxu0 0.0
    %667 = vmatprep.subr.mxu0 0.0
    %668 = vmatpush1.msra.mxu0 0.0
    %669 = vmatprep.subr.mxu0 0.0
    %670 = vmatpush1.msra.mxu0 0.0
    %671 = vmatprep.subr.mxu0 0.0
    %672 = vmatpush1.msra.mxu0 0.0
    %673 = vmatprep.subr.mxu0 0.0
    %674 = vmatpush1.msra.mxu0 0.0
    %675 = vmatprep.subr.mxu0 0.0
    %676 = vmatpush1.msra.mxu0 0.0
    %677 = vmatprep.subr.mxu0 0.0
    %678 = vmatpush1.msra.mxu0 0.0
    %679 = vmatprep.subr.mxu0 0.0
    %680 = vmatpush1.msra.mxu0 0.0
    %681 = vmatprep.subr.mxu0 0.0
    %682 = vmatpush1.msra.mxu0 0.0
    %683 = vmatprep.subr.mxu0 0.0
    %684 = vmatpush1.msra.mxu0 0.0
    %685 = vmatprep.subr.mxu0 0.0
    %686 = vmatpush1.msra.mxu0 0.0
    %687 = vmatprep.subr.mxu0 0.0
    %688 = vmatpush1.msra.mxu0 0.0
    %689 = vmatprep.subr.mxu0 0.0
    %690 = vmatpush1.msra.mxu0 0.0
    %691 = vmatprep.subr.mxu0 0.0
    %692 = vmatpush1.msra.mxu0 0.0
    %693 = vmatprep.subr.mxu0 0.0
    %694 = vmatpush1.msra.mxu0 0.0
    %695 = vmatprep.subr.mxu0 0.0
    %696 = vmatpush1.msra.mxu0 0.0
    %697 = vmatprep.subr.mxu0 0.0
    %698 = vmatpush1.msra.mxu0 0.0
    %699 = vmatprep.subr.mxu0 0.0
    %700 = vmatpush1.msra.mxu0 0.0
    %701 = vmatprep.subr.mxu0 0.0
    %702 = vmatpush1.msra.mxu0 0.0
    %703 = vmatprep.subr.mxu0 0.0
    %704 = vmatpush1.msra.mxu0 0.0
    %705 = vmatprep.subr.mxu0 0.0
    %706 = vmatpush1.msra.mxu0 0.0
    %707 = vmatprep.subr.mxu0 0.0
    %708 = vmatpush1.msra.mxu0 0.0
    %709 = vmatprep.subr.mxu0 0.0
    %710 = vmatpush1.msra.mxu0 0.0
    %711 = vmatprep.subr.mxu0 0.0
    %712 = vmatpush1.msra.mxu0 0.0
    %713 = vmatprep.subr.mxu0 0.0
    %714 = vmatpush1.msra.mxu0 0.0
    %715 = vmatprep.mubr.f32.mxu0 0.0
    %716 = vmatmul.mubr.f32.gmra.mrb[0].mxu0 %v647
    %v717 = vpop.f32.mrb[0].mxu0
    %v718 = vadd.f32 0.0, %v717
    %v719 = vpop.f32.mrb[0].mxu0
    %720 = vmatprep.mubr.f32.mxu0 0.0
    %721 = vmatmul.mubr.f32.gmra.mrb[0].mxu0 %v649
    %v722 = vpop.f32.mrb[0].mxu0
    %v723 = vadd.f32 0.0, %v722
    %v724 = vpop.f32.mrb[0].mxu0
    %725 = vdwg.mxu0
    %v726 = vsel %vm220, %v97, 0.0
    %727 = vadd.xlane.f32.xlu0 %v726
    %v728 = vpop.xlane.xlu0 %727
    %v729 = vsel %vm220, %v98, 0.0
    %730 = vadd.xlane.f32.xlu0 %v729
    %v731 = vpop.xlane.xlu0 %730
    %v732 = vadd.f32 %v291, %v718
    %v733 = vadd.f32 %v364, %v723
    %v734 = vlaneseq
    %v735 = vshrl.u32 %v734, 7
    %v736 = vsub.s32 2, %v735
    %v737 = vrot.slane %v115, %v736
    %739 = vrot.lane.b32.xlu0 %v737, 32
    %v740 = vpop.permute.xlu0 %739
    %v742 = vadd.f32 %v198, %v740
    %v743 = vadd.f32 %v204, %v740
    %v744 = vmul.f32 %v728, %v742
    %v745 = vmul.f32 %v731, %v743
    %748 = vrot.lane.b32.xlu0 %v744, 96
    %v749 = vpop.permute.xlu0 %748
    %750 = vrot.lane.b32.xlu0 %v745, 96
    %v751 = vpop.permute.xlu0 %750
    %v754 = vadd.f32 %v732, %v749
    %v755 = vadd.f32 %v733, %v751
    %v756 = vld [vmem:[#allocation10] sm:$0xff]
    %v757 = vld [vmem:[#allocation10 + $0x8] sm:$0xff]
    %v758 = vld [vmem:[#allocation10 + $0x10] sm:$0xff]
    %v759 = vld [vmem:[#allocation10 + $0x18] sm:$0xff]
    %v760 = vlaneseq
    %v761 = vshrl.u32 %v760, 7
    %v762 = vsub.s32 1, %v761
    %v763 = vrot.slane %v115, %v762
    %v765 = vsel %vm124, %v754, 0
    %v768 = vsel %vm124, %v755, 0
    %770 = vmatprep.subr.mxu0 0.0
    %771 = vmatpush1.msra.mxu0 %v756
    %772 = vmatprep.subr.mxu0 0.0
    %773 = vmatpush1.msra.mxu0 %v757
    %774 = vmatprep.subr.mxu0 0.0
    %775 = vmatpush1.msra.mxu0 %v758
    %776 = vmatprep.subr.mxu0 0.0
    %777 = vmatpush1.msra.mxu0 %v759
    %778 = vmatprep.subr.mxu0 0.0
    %779 = vmatpush1.msra.mxu0 0.0
    %780 = vmatprep.subr.mxu0 0.0
    %781 = vmatpush1.msra.mxu0 0.0
    %782 = vmatprep.subr.mxu0 0.0
    %783 = vmatpush1.msra.mxu0 0.0
    %784 = vmatprep.subr.mxu0 0.0
    %785 = vmatpush1.msra.mxu0 0.0
    %786 = vmatprep.subr.mxu0 0.0
    %787 = vmatpush1.msra.mxu0 0.0
    %788 = vmatprep.subr.mxu0 0.0
    %789 = vmatpush1.msra.mxu0 0.0
    %790 = vmatprep.subr.mxu0 0.0
    %791 = vmatpush1.msra.mxu0 0.0
    %792 = vmatprep.subr.mxu0 0.0
    %793 = vmatpush1.msra.mxu0 0.0
    %794 = vmatprep.subr.mxu0 0.0
    %795 = vmatpush1.msra.mxu0 0.0
    %796 = vmatprep.subr.mxu0 0.0
    %797 = vmatpush1.msra.mxu0 0.0
    %798 = vmatprep.subr.mxu0 0.0
    %799 = vmatpush1.msra.mxu0 0.0
    %800 = vmatprep.subr.mxu0 0.0
    %801 = vmatpush1.msra.mxu0 0.0
    %802 = vmatprep.subr.mxu0 0.0
    %803 = vmatpush1.msra.mxu0 0.0
    %804 = vmatprep.subr.mxu0 0.0
    %805 = vmatpush1.msra.mxu0 0.0
    %806 = vmatprep.subr.mxu0 0.0
    %807 = vmatpush1.msra.mxu0 0.0
    %808 = vmatprep.subr.mxu0 0.0
    %809 = vmatpush1.msra.mxu0 0.0
    %810 = vmatprep.subr.mxu0 0.0
    %811 = vmatpush1.msra.mxu0 0.0
    %812 = vmatprep.subr.mxu0 0.0
    %813 = vmatpush1.msra.mxu0 0.0
    %814 = vmatprep.subr.mxu0 0.0
    %815 = vmatpush1.msra.mxu0 0.0
    %816 = vmatprep.subr.mxu0 0.0
    %817 = vmatpush1.msra.mxu0 0.0
    %818 = vmatprep.subr.mxu0 0.0
    %819 = vmatpush1.msra.mxu0 0.0
    %820 = vmatprep.subr.mxu0 0.0
    %821 = vmatpush1.msra.mxu0 0.0
    %822 = vmatprep.subr.mxu0 0.0
    %823 = vmatpush1.msra.mxu0 0.0
    %824 = vmatprep.subr.mxu0 0.0
    %825 = vmatpush1.msra.mxu0 0.0
    %826 = vmatprep.subr.mxu0 0.0
    %827 = vmatpush1.msra.mxu0 0.0
    %828 = vmatprep.subr.mxu0 0.0
    %829 = vmatpush1.msra.mxu0 0.0
    %830 = vmatprep.subr.mxu0 0.0
    %831 = vmatpush1.msra.mxu0 0.0
    %832 = vmatprep.subr.mxu0 0.0
    %833 = vmatpush1.msra.mxu0 0.0
    %834 = vmatprep.mubr.f32.mxu0 0.0
    %835 = vmatmul.mubr.f32.gmra.mrb[0].mxu0 %v765
    %v836 = vpop.f32.mrb[0].mxu0
    %v837 = vadd.f32 %v763, %v836
    %v838 = vpop.f32.mrb[0].mxu0
    %839 = vmatprep.mubr.f32.mxu0 0.0
    %840 = vmatmul.mubr.f32.gmra.mrb[0].mxu0 %v768
    %v841 = vpop.f32.mrb[0].mxu0
    %v842 = vadd.f32 %v763, %v841
    %v843 = vpop.f32.mrb[0].mxu0
    %844 = vdwg.mxu0
    %847 = vrot.lane.b32.xlu0 %v837, 64
    %v848 = vpop.permute.xlu0 %847
    %849 = vrot.lane.b32.xlu0 %v842, 64
    %v850 = vpop.permute.xlu0 %849
    %v853 = vadd.f32 %v216, %v848
    %v854 = vadd.f32 %v218, %v850
    %v855 = vxor.u32 %v853, 2147483648
    %v856 = vxor.u32 %v854, 2147483648
    %v857 = vmul.f32 %v855, 1.442695
    %v858 = vpow.pop %v857
    %v859 = vmul.f32 %v856, 1.442695
    %v860 = vpow.pop %v859
    %v861 = vadd.f32 %v858, 1.0
    %v862 = vadd.f32 %v860, 1.0
    %v863 = vrcp.pop %v861
    %v864 = vmul.f32 1.0, %v863
    %v865 = vrcp.pop %v862
    %v866 = vmul.f32 1.0, %v865
    %v867 = vmul.f32 %v864, %v837
    %v868 = vmul.f32 %v866, %v842
    %871 = vrot.lane.b32.xlu0 %v867, 64
    %v872 = vpop.permute.xlu0 %871
    %873 = vrot.lane.b32.xlu0 %v868, 64
    %v874 = vpop.permute.xlu0 %873
    %v877 = vadd.f32 %v217, %v872
    %v878 = vadd.f32 %v219, %v874
    %v879 = vtanh.pop %v877
    %v880 = vtanh.pop %v878
    %v881 = vsub.f32 1.0, %v864
    %v882 = vsub.f32 1.0, %v866
    %885 = vrot.lane.b32.xlu0 %v879, 96
    %v886 = vpop.permute.xlu0 %885
    %887 = vrot.lane.b32.xlu0 %v880, 96
    %v888 = vpop.permute.xlu0 %887
    %v891 = vmul.f32 %v881, %v886
    %v892 = vmul.f32 %v882, %v888
    %893 = vrot.lane.b32.xlu0 %v754, 96
    %v894 = vpop.permute.xlu0 %893
    %895 = vrot.lane.b32.xlu0 %v755, 96
    %v896 = vpop.permute.xlu0 %895
    %v899 = vmul.f32 %v864, %v894
    %v900 = vmul.f32 %v866, %v896
    %v901 = vadd.f32 %v891, %v899
    %v902 = vadd.f32 %v892, %v900
    %v903 = vmax.f32 %v901, 0.0
    %v904 = vmax.f32 %v902, 0.0
    %907 = vrot.lane.b32.xlu0 %v903, 32
    %v908 = vpop.permute.xlu0 %907
    %909 = vrot.lane.b32.xlu0 %v904, 32
    %v910 = vpop.permute.xlu0 %909
    %913 = vst.msk [vmem:[#allocation11] sm:$0xff] %vm124, %v908
    %914 = vst.msk [vmem:[#allocation11 + $0x8] sm:$0xff] %vm124, %v910
    // Predicated region
    $region50: #{tpu_custom_call.1} parent=1 // pred_check
      _
    $region51: #{tpu_custom_call.1} parent=1 // pred_check_branch
      %916 = sbr.rel (0) target = $region53
    $region52: #{tpu_custom_call.1} parent=1 // pred_region
      %s918 = ssub.s32 256, 256
      %919 = vsyncadd [#allocation4], %s918
      %s920 = sshll.u32 [#allocation11], 4
      %s921 = int_to_ptr.vmem [resolvable:$true] %s920
      %926 = dma.vmem_to_hbm [thread:$0]  %s921, 256, %s7, [#allocation4], 128, 128, 8
    $region53: #{tpu_custom_call.1} parent=1 // pred_fallthru
      _
    // Predicated region
    $region54: #{tpu_custom_call.1} parent=1 // pred_check
      _
    $region55: #{tpu_custom_call.1} parent=1 // pred_check_branch
      %928 = sbr.rel (0) target = $region57
    $region56: #{tpu_custom_call.1} parent=1 // pred_region
      %929 = dma.done [#allocation4], 256
    $region57: #{tpu_custom_call.1} parent=1 // pred_fallthru
      _
    %930 = vsyncpa [#allocation3], 1
    %931 = vsyncpa [#allocation6], 1
    %932 = vsyncpa [#allocation9], 1
    %933 = vsyncpa [#allocation4], 1

</llo_original>
